<compile_context>
chip_gen: v7x
topology: tpu7x:2x2x1
jax: 0.10.0
libtpu: 0.0.40
codegen_flags: <defaults>
</compile_context>

<pallas_src>
import jax
import jax.numpy as jnp
from jax.experimental import pallas as pl
from jax.experimental.pallas import tpu as pltpu

_BN_EPS = 1e-5


def head_kernel(feat_ref, wa_ref, wm_ref, b_ref, out_ref):
    """One grid step == (one batch tile, one magnification).

    feat_ref: (1, Bt, HW, C) channels-last backbone feature block (bf16)
    wa_ref  : (C, F) fc1 weight half for the avg-pool features (bf16),
              with BN scale and 1/HW folded in
    wm_ref  : (C, F) fc1 weight half for the max-pool features (bf16),
              with BN scale folded in
    b_ref   : (1, F) fc1 bias with BN shift folded in (f32)
    out_ref : (Bt, F) block of the (B, M*F) output (torch.cat(ftrs, 1) layout)
    """
    x = feat_ref[0]                                    # (Bt, HW, C), native bf16

    # Fused-widening reductions over the spatial (sublane) axis: no full-block
    # f32 temporary.  Sum-pool accumulates in f32 (1/HW folded into wa_ref);
    # max-pool is exact in bf16.
    s = jnp.sum(x, axis=-2, dtype=jnp.float32)         # (Bt, C)
    m = jnp.max(x, axis=-2)                            # (Bt, C)

    s16 = s.astype(jnp.bfloat16)
    m16 = m.astype(jnp.bfloat16)

    # BatchNorm1d(eval) + fc1 collapse into two accumulating MXU dots
    # (split-K avoids materializing the (Bt, 2C) concat), then bias + ReLU.
    y = jnp.dot(s16, wa_ref[...], preferred_element_type=jnp.float32)
    y = y + jnp.dot(m16, wm_ref[...], preferred_element_type=jnp.float32)
    y = y + b_ref[...]
    out_ref[...] = jnp.maximum(y, 0.0).astype(out_ref.dtype)


def _round_up(x, m):
    return -(-x // m) * m


def _tpu_vmem_capacity():
    """(vmem_capacity_bytes, known) — trace-time hardware query, guarded."""
    try:
        info = pltpu.get_tpu_info()
        cap = int(getattr(info, "vmem_capacity_bytes", 0))
        if cap > 0:
            return cap, True
    except Exception:
        pass
    return 64 << 20, False  # conservative (v7x-sized) fallback


def _pick_batch_tile(batch, hw, chans, feat_itemsize, f_out, *,
                     vmem_limit, num_feat_buffers, target_block_bytes):
    """VMEM-accurate batch tile for channels-last feature blocks.

    Accounts for lane (C -> 128) / sublane (HW -> 8) padding, the feature
    buffer count, and the resident (double-buffered) folded weights/bias.
    """
    # One batch row of a feature block as laid out in VMEM.
    row = _round_up(hw, 8) * _round_up(chans, 128) * feat_itemsize
    # Grid-invariant residents: two (C, F) bf16 weight halves + (1, F) f32 bias,
    # each double-buffered by the default pipeline.
    resident = 2 * 2 * chans * _round_up(f_out, 128) * 2
    resident += 2 * 8 * _round_up(f_out, 128) * 4
    slack = 4 << 20  # output blocks + compiler-internal scratch
    budget = max(vmem_limit - resident - slack, row * num_feat_buffers)
    per_buffer = min(target_block_bytes, budget // num_feat_buffers)
    bt = max(1, int(per_buffer // row))
    bt = min(bt, batch)
    if bt >= 8:
        bt = (bt // 8) * 8
    return bt


def _feature_spec(block_shape, index_map, num_buffers):
    """Feature BlockSpec; requests deeper buffering only when asked and only
    if this JAX build supports pipeline_mode (narrow construction-time gate)."""
    if num_buffers != 2 and hasattr(pl, "Buffered"):
        try:
            return pl.BlockSpec(block_shape, index_map,
                                pipeline_mode=pl.Buffered(num_buffers))
        except TypeError:
            pass
    return pl.BlockSpec(block_shape, index_map)


def ftrs_shared_net_head(feats_nhwc, bn_gamma, bn_beta, bn_mean, bn_var,
                         fc_w, fc_b, *, batch_tile=None):
    """Runs the MISO shared head for all magnifications.

    feats_nhwc: (M, B, H, W, C) per-magnification backbone feature maps,
                channels-last (natural TPU conv layout), backbone-native dtype
                (e.g. bf16).  No host-side transpose/cast is performed.
    bn_*      : (2*C,)        BatchNorm1d params / running stats (eval mode)
    fc_w      : (F, 2*C), fc_b: (F,)   with F = 2*C // 4
    returns   : (B, M * F)    matches torch.cat(ftrs, 1)
    """
    M, B, H, W, C = feats_nhwc.shape
    HW = H * W
    num_ftrs = 2 * C
    f_out = num_ftrs // 4
    assert fc_w.shape == (f_out, num_ftrs)

    # Free reshape: channels-last with spatial flattened onto the sublane axis.
    feats = feats_nhwc.reshape(M, B, HW, C)

    # Fold BatchNorm1d (eval) and the avg-pool 1/HW into fc1:
    #   bn(p)   = p * scale + shift,  scale = gamma * rsqrt(var + eps)
    #   fc1(bn) = p @ (W^T * scale[:, None]) + (shift @ W^T + b)
    # Then split the folded weight into avg / max halves (split-K), bf16.
    scale = bn_gamma.astype(jnp.float32) * jax.lax.rsqrt(
        bn_var.astype(jnp.float32) + _BN_EPS)                        # (2C,)
    shift = bn_beta.astype(jnp.float32) - bn_mean.astype(jnp.float32) * scale
    w_t = fc_w.astype(jnp.float32).T                                 # (2C, F)
    b_folded = (fc_b.astype(jnp.float32) + shift @ w_t).reshape(1, f_out)
    w_avg = (w_t[:C] * (scale[:C] / HW)[:, None]).astype(jnp.bfloat16)  # (C, F)
    w_max = (w_t[C:] * scale[C:][:, None]).astype(jnp.bfloat16)        # (C, F)

    # Per-generation VMEM sizing.
    vmem_cap, cap_known = _tpu_vmem_capacity()
    vmem_limit = int(max(min(vmem_cap - (12 << 20), 100 << 20), 32 << 20))
    small_vmem = cap_known and vmem_cap <= (64 << 20)     # v7x-class
    n_feat_bufs = 3 if small_vmem else 2
    target_block = (3 << 20) if small_vmem else (12 << 20)

    if batch_tile is None:
        batch_tile = _pick_batch_tile(
            B, HW, C, feats.dtype.itemsize, f_out,
            vmem_limit=vmem_limit, num_feat_buffers=n_feat_bufs,
            target_block_bytes=target_block)
    bt = max(1, min(int(batch_tile), B))

    # Batch-tile axis leads: larger (and typically even) count -> balanced
    # megacore split on v7x; no effect on single-TC v5e/v6e.
    grid = (pl.cdiv(B, bt), M)

    feat_spec = _feature_spec((1, bt, HW, C), lambda bi, m: (m, bi, 0, 0),
                              n_feat_bufs)

    def const_spec(shape):
        return pl.BlockSpec(shape, lambda bi, m: (0,) * len(shape))

    return pl.pallas_call(
        head_kernel,
        out_shape=jax.ShapeDtypeStruct((B, M * f_out), jnp.float32),
        grid_spec=pltpu.PrefetchScalarGridSpec(
            num_scalar_prefetch=0,
            grid=grid,
            in_specs=[
                feat_spec,                       # (1, bt, HW, C) feature block
                const_spec((C, f_out)),          # folded avg-half weight (bf16)
                const_spec((C, f_out)),          # folded max-half weight (bf16)
                const_spec((1, f_out)),          # folded bias (f32)
            ],
            # Output written directly in torch.cat(ftrs, 1) layout:
            # batch-tile rows, magnification-major lane-dense F-wide columns.
            out_specs=pl.BlockSpec((bt, f_out), lambda bi, m: (bi, m)),
        ),
        compiler_params=pltpu.CompilerParams(
            dimension_semantics=("parallel", "parallel"),
            vmem_limit_bytes=vmem_limit),
    )(feats, w_avg, w_max, b_folded)


def reference_head(feats_nhwc, bn_gamma, bn_beta, bn_mean, bn_var, fc_w, fc_b):
    """Pure-JAX reference mirroring the PyTorch forward (BN in eval mode)."""
    M = feats_nhwc.shape[0]
    outs = []
    for i in range(M):
        x = feats_nhwc[i].astype(jnp.float32)               # (B, H, W, C)
        avg = jnp.mean(x, axis=(1, 2))                       # (B, C)
        mx = jnp.max(x, axis=(1, 2))                         # (B, C)
        pooled = jnp.concatenate([avg, mx], axis=1)          # (B, 2C)
        bn = (pooled - bn_mean) / jnp.sqrt(bn_var + _BN_EPS) * bn_gamma + bn_beta
        y = jax.nn.relu(jnp.dot(bn, fc_w.T,
                                precision=jax.lax.Precision.HIGHEST) + fc_b)
        outs.append(y)
    return jnp.concatenate(outs, axis=1)


if __name__ == "__main__":
    # Small stand-in for a resnet backbone output (real: C=512/2048, HW=49).
    # C=256 -> num_ftrs=512, F=128 so output blocks are lane-dense (128).
    M, B, C, H, W = 3, 16, 256, 4, 4          # num_mags=3, batch=16
    num_ftrs = 2 * C
    f_out = num_ftrs // 4                     # 128

    key = jax.random.PRNGKey(0)
    k_feat, k_g, k_b, k_m, k_v, k_w, k_bias = jax.random.split(key, 7)

    # Backbone-native bf16 features, channels-last (M, B, H, W, C).
    feats = jax.random.normal(
        k_feat, (M, B, H, W, C), dtype=jnp.float32).astype(jnp.bfloat16)

    # Deterministic parameter initialization (shapes per module __init__).
    bn_gamma = 1.0 + 0.1 * jax.random.normal(k_g, (num_ftrs,), dtype=jnp.float32)
    bn_beta = 0.1 * jax.random.normal(k_b, (num_ftrs,), dtype=jnp.float32)
    bn_mean = 0.1 * jax.random.normal(k_m, (num_ftrs,), dtype=jnp.float32)
    bn_var = jnp.abs(jax.random.normal(k_v, (num_ftrs,), dtype=jnp.float32)) + 0.5
    fc_w = 0.05 * jax.random.normal(k_w, (f_out, num_ftrs), dtype=jnp.float32)
    fc_b = 0.05 * jax.random.normal(k_bias, (f_out,), dtype=jnp.float32)

    # batch_tile=8 -> two batch tiles, exercising the (B-tiles, M) grid.
    out = ftrs_shared_net_head(feats, bn_gamma, bn_beta, bn_mean, bn_var,
                               fc_w, fc_b, batch_tile=8)
    out = jax.block_until_ready(out)

    ref = reference_head(feats, bn_gamma, bn_beta, bn_mean, bn_var, fc_w, fc_b)
    ref = jax.block_until_ready(ref)

    assert out.shape == (B, M * f_out), out.shape
    max_err = float(jnp.max(jnp.abs(out - ref)))
    # bf16 MXU operands (folded weights + pooled features) vs f32-HIGHEST ref.
    assert jnp.allclose(out, ref, rtol=5e-2, atol=5e-2), max_err

    print("KERNEL_OK")
</pallas_src>

<mosaic_0001>
module attributes {stable_mosaic.version = 11 : i64} {
  func.func @head_kernel(%arg0: i32, %arg1: i32, %arg2: memref<1x8x16x256xbf16, #tpu.memory_space<vmem>>, %arg3: memref<256x128xbf16, #tpu.memory_space<vmem>>, %arg4: memref<256x128xbf16, #tpu.memory_space<vmem>>, %arg5: memref<1x128xf32, #tpu.memory_space<vmem>>, %arg6: memref<8x128xf32, #tpu.memory_space<vmem>>) attributes {dimension_semantics = [#tpu.dimension_semantics<parallel>, #tpu.dimension_semantics<parallel>], iteration_bounds = array<i64: 2, 3>, scalar_prefetch = 0 : i64, scratch_operands = 0 : i64, tpu.core_type = #tpu.core_type<tc>, window_params = [{transform_indices = @transform_0, window_bounds = array<i64: 1, 8, 16, 256>}, {pipeline_mode = #tpu.pipeline_mode<synchronous>, transform_indices = @transform_1, window_bounds = array<i64: 256, 128>}, {pipeline_mode = #tpu.pipeline_mode<synchronous>, transform_indices = @transform_2, window_bounds = array<i64: 256, 128>}, {pipeline_mode = #tpu.pipeline_mode<synchronous>, transform_indices = @transform_3, window_bounds = array<i64: 1, 128>}, {transform_indices = @transform_4, window_bounds = array<i64: 8, 128>}]} {
    %c0 = arith.constant 0 : index
    %c0_0 = arith.constant 0 : index
    %c0_1 = arith.constant 0 : index
    %c0_2 = arith.constant 0 : index
    %0 = vector.load %arg2[%c0, %c0_0, %c0_1, %c0_2] : memref<1x8x16x256xbf16, #tpu.memory_space<vmem>>, vector<1x8x16x256xbf16>
    %1 = vector.shape_cast %0 : vector<1x8x16x256xbf16> to vector<8x16x256xbf16>
    %2 = arith.extf %1 : vector<8x16x256xbf16> to vector<8x16x256xf32>
    %cst = arith.constant dense<0.000000e+00> : vector<8x256xf32>
    %3 = vector.multi_reduction <add>, %2, %cst [1] : vector<8x16x256xf32> to vector<8x256xf32>
    %cst_3 = arith.constant dense<0xFF80> : vector<8x256xbf16>
    %4 = vector.multi_reduction <maximumf>, %1, %cst_3 [1] : vector<8x16x256xbf16> to vector<8x256xbf16>
    %5 = arith.truncf %3 : vector<8x256xf32> to vector<8x256xbf16>
    %c0_4 = arith.constant 0 : index
    %c0_5 = arith.constant 0 : index
    %6 = vector.load %arg3[%c0_4, %c0_5] : memref<256x128xbf16, #tpu.memory_space<vmem>>, vector<256x128xbf16>
    %cst_6 = arith.constant dense<0.000000e+00> : vector<8x128xf32>
    %7 = tpu.matmul %5, %6, %cst_6 {dimension_numbers = #tpu.dot_dimension_numbers<[1], [0], [0], [1], [0, 0, 1, 1], [], []>} : vector<8x256xbf16>, vector<256x128xbf16>, vector<8x128xf32> -> vector<8x128xf32>
    %c0_7 = arith.constant 0 : index
    %c0_8 = arith.constant 0 : index
    %8 = vector.load %arg4[%c0_7, %c0_8] : memref<256x128xbf16, #tpu.memory_space<vmem>>, vector<256x128xbf16>
    %cst_9 = arith.constant dense<0.000000e+00> : vector<8x128xf32>
    %9 = tpu.matmul %4, %8, %cst_9 {dimension_numbers = #tpu.dot_dimension_numbers<[1], [0], [0], [1], [0, 0, 1, 1], [], []>} : vector<8x256xbf16>, vector<256x128xbf16>, vector<8x128xf32> -> vector<8x128xf32>
    %10 = arith.addf %7, %9 : vector<8x128xf32>
    %c0_10 = arith.constant 0 : index
    %c0_11 = arith.constant 0 : index
    %11 = vector.load %arg5[%c0_10, %c0_11] : memref<1x128xf32, #tpu.memory_space<vmem>>, vector<1x128xf32>
    %12 = vector.broadcast %11 : vector<1x128xf32> to vector<8x128xf32>
    %13 = arith.addf %10, %12 : vector<8x128xf32>
    %cst_12 = arith.constant 0.000000e+00 : f32
    %14 = vector.broadcast %cst_12 : f32 to vector<8x128xf32>
    %15 = arith.maximumf %13, %14 : vector<8x128xf32>
    %c0_13 = arith.constant 0 : index
    %c0_14 = arith.constant 0 : index
    %16 = vector.load %arg6[%c0_13, %c0_14] : memref<8x128xf32, #tpu.memory_space<vmem>>, vector<8x128xf32>
    tpu.vector_store %arg6[%c0_13, %c0_14], %15 {strides = array<i32>} : memref<8x128xf32, #tpu.memory_space<vmem>>, vector<8x128xf32>,
    return
  }
  func.func @transform_0(%arg0: i32, %arg1: i32) -> (i32, i32, i32, i32) {
    %c0_i32 = arith.constant 0 : i32
    %c0_i32_0 = arith.constant 0 : i32
    %c0_i32_1 = arith.constant 0 : i32
    return %arg1, %arg0, %c0_i32, %c0_i32_0 : i32, i32, i32, i32
  }
  func.func @transform_1(%arg0: i32, %arg1: i32) -> (i32, i32) {
    %c0_i32 = arith.constant 0 : i32
    %c0_i32_0 = arith.constant 0 : i32
    %c0_i32_1 = arith.constant 0 : i32
    return %c0_i32, %c0_i32_0 : i32, i32
  }
  func.func @transform_2(%arg0: i32, %arg1: i32) -> (i32, i32) {
    %c0_i32 = arith.constant 0 : i32
    %c0_i32_0 = arith.constant 0 : i32
    %c0_i32_1 = arith.constant 0 : i32
    return %c0_i32, %c0_i32_0 : i32, i32
  }
  func.func @transform_3(%arg0: i32, %arg1: i32) -> (i32, i32) {
    %c0_i32 = arith.constant 0 : i32
    %c0_i32_0 = arith.constant 0 : i32
    %c0_i32_1 = arith.constant 0 : i32
    return %c0_i32, %c0_i32_0 : i32, i32
  }
  func.func @transform_4(%arg0: i32, %arg1: i32) -> (i32, i32) {
    %c0_i32 = arith.constant 0 : i32
    return %arg0, %arg1 : i32, i32
  }
}

</mosaic_0001>

<llo_original>
// kernel: tpu_custom_call.1
$region0: #{tpu_custom_call.1}
  #allocation0 [shape = 'u32[]', space=smem, size = 0x4, offset = 0x4, fixed_abs, tag = 'smem constant byte address 0x4 - core index']
  #allocation1 [shape = 'u32[144,128]{1,0:T(1,128)}', space=vmem, size = 0x12000, scoped, tag = 'internal scratch']
  %s0 = inlined_call_operand.hbm [shape: bf16[3,16,16,256], index: 0, kind: input, shape index: {}]
  %s1 = inlined_call_operand.hbm [shape: bf16[256,128], index: 1, kind: input, shape index: {}]
  %s2 = inlined_call_operand.hbm [shape: bf16[256,128], index: 2, kind: input, shape index: {}]
  %s3 = inlined_call_operand.vmem [shape: f32[1,128], index: 3, kind: input, shape index: {}]
  %s4 = inlined_call_operand.hbm [shape: f32[16,384], index: 4, kind: output, shape index: {}]
  %s5 = sld [smem:[#allocation0]]
  $region61: #{tpu_custom_call.1} parent=0
    _
  %s7 = ssub.s32 1, %s5
  %s8 = scalar_select 0, %s7, %s5
  $region1: #{tpu_custom_call.1} parent=0
    #allocation2 [shape = 'u8[131072]{0}', space=vmem, size = 0x20000, scoped, tag = 'input window, operand 0']
    #allocation3 [shape = 's32[2]{0}', space=sflag, size = 0x8, scoped, tag = 'scoped memory for tpu_custom_call.1']
    #allocation4 [shape = 's32[2]{0}', space=sflag, size = 0x8, scoped, tag = 'scoped memory for tpu_custom_call.1']
    #allocation5 [shape = 'u8[65536]{0}', space=vmem, size = 0x10000, scoped, tag = 'input window, operand 1, single buffered']
    #allocation6 [shape = 's32[1]{0}', space=sflag, size = 0x4, scoped, tag = 'scoped memory for tpu_custom_call.1']
    #allocation7 [shape = 'u8[65536]{0}', space=vmem, size = 0x10000, scoped, tag = 'input window, operand 2, single buffered']
    #allocation8 [shape = 'u8[8192]{0}', space=vmem, size = 0x2000, scoped, tag = 'output window, operand 0']
    %9 = vsyncpa [#allocation3], 0
    %s10 = scalar_lea.sflag [#allocation3], 1
    %11 = vsyncpa %s10, 0
    %12 = vsyncpa [#allocation6], 0
    %13 = vsyncpa [#allocation4], 0
    %s14 = scalar_lea.sflag [#allocation4], 1
    %15 = vsyncpa %s14, 0
    loop: start=0, step=1, limit=8
    $region2: #{tpu_custom_call.1} parent=1 // loop_pre_header
      _
    $region3: #{tpu_custom_call.1} parent=1 // loop_header
      %s17 = sphi 0, %s21
      %p18 = scmp.ge.s32.totalorder %s17, 8
      %s24 = sphi 0, %s36
      %s25 = sphi 0, %s32
      %s26 = sphi 0, %s24
      %s27 = sphi 0, %s25
      %s28 = sphi 0, %s26
      %s29 = sphi 0, %s27
      %s41 = sphi 0, %s43
      %s44 = sphi 0, %s41
      %s45 = sphi 0, %s44
      %s61 = sphi 0, %s45
      %s65 = sphi 0, %s65
      %s67 = sphi 0, %s65
      %s68 = sphi 0, %s67
      %s82 = sphi 0, %s68
      %s86 = sphi 0, %s86
      %s88 = sphi 0, %s86
      %s89 = sphi 0, %s88
      %s103 = sphi 0, %s89
      %s107 = sphi 0, %s107
      %s109 = sphi 0, %s107
      %s110 = sphi 0, %s109
      %s124 = sphi 0, %s110
      %s132 = sphi 0, %s134
      %s135 = sphi 0, %s132
      %s136 = sphi 0, %s135
      %s152 = sphi 0, %s136
    $region4: #{tpu_custom_call.1} parent=1 // loop_header_branch
      %20 = sbr.rel (%p18) target = $region8
    $region5: #{tpu_custom_call.1} parent=1 // loop_body
      %s22 = ssub.s32 %s17, 1
      %s23 = ssub.s32 %s17, 2
      %s30 = sadd.s32 1, %s25
      %p31 = scmp.ge.s32.totalorder %s30, 3
      %s32 = scalar_select %p31, 0, %s30
      %s33 = sadd.s32 1, %s24
      %s34 = scalar_select %p31, %s33, %s24
      %p35 = scmp.ge.s32.totalorder %s34, 2
      %s36 = scalar_select %p35, 0, %s34
      %s37 = ssub.s32 %s25, %s32
      %s38 = ssub.s32 %s24, %s36
      %s39 = sor.u32 %s37, %s38
      %p40 = scmp.eq.s32.totalorder %s39, 0
      %s42 = sadd.s32 %s41, 1
      %s43 = scalar_select %p40, %s41, %s42
      %p46 = pneg %p40
      %p47 = scmp.eq.s32.totalorder %s17, 5
      %p48 = por %p46, %p47
      %p49 = scmp.ne.s32.totalorder %s41, %s44
      %p50 = scmp.eq.s32.totalorder %s17, 0
      %p51 = por %p49, %p50
      %p52 = scmp.ne.s32.totalorder %s41, %s44
      %p53 = scmp.eq.s32.totalorder %s22, 5
      %p54 = por %p52, %p53
      %p55 = scmp.ne.s32.totalorder %s44, %s45
      %p56 = scmp.eq.s32.totalorder %s22, 0
      %p57 = por %p55, %p56
      %p58 = scmp.ne.s32.totalorder %s44, %s45
      %p59 = scmp.eq.s32.totalorder %s23, 5
      %p60 = por %p58, %p59
      %p62 = scmp.ne.s32.totalorder %s45, %s61
      %p63 = scmp.eq.s32.totalorder %s23, 0
      %p64 = por %p62, %p63
      %s66 = sadd.s32 %s65, 1
      %p69 = scmp.eq.s32.totalorder %s17, 5
      %p70 = scmp.ne.s32.totalorder %s65, %s67
      %p71 = scmp.eq.s32.totalorder %s17, 0
      %p72 = por %p70, %p71
      %p73 = scmp.ne.s32.totalorder %s65, %s67
      %p74 = scmp.eq.s32.totalorder %s22, 5
      %p75 = por %p73, %p74
      %p76 = scmp.ne.s32.totalorder %s67, %s68
      %p77 = scmp.eq.s32.totalorder %s22, 0
      %p78 = por %p76, %p77
      %p79 = scmp.ne.s32.totalorder %s67, %s68
      %p80 = scmp.eq.s32.totalorder %s23, 5
      %p81 = por %p79, %p80
      %p83 = scmp.ne.s32.totalorder %s68, %s82
      %p84 = scmp.eq.s32.totalorder %s23, 0
      %p85 = por %p83, %p84
      %s87 = sadd.s32 %s86, 1
      %p90 = scmp.eq.s32.totalorder %s17, 5
      %p91 = scmp.ne.s32.totalorder %s86, %s88
      %p92 = scmp.eq.s32.totalorder %s17, 0
      %p93 = por %p91, %p92
      %p94 = scmp.ne.s32.totalorder %s86, %s88
      %p95 = scmp.eq.s32.totalorder %s22, 5
      %p96 = por %p94, %p95
      %p97 = scmp.ne.s32.totalorder %s88, %s89
      %p98 = scmp.eq.s32.totalorder %s22, 0
      %p99 = por %p97, %p98
      %p100 = scmp.ne.s32.totalorder %s88, %s89
      %p101 = scmp.eq.s32.totalorder %s23, 5
      %p102 = por %p100, %p101
      %p104 = scmp.ne.s32.totalorder %s89, %s103
      %p105 = scmp.eq.s32.totalorder %s23, 0
      %p106 = por %p104, %p105
      %s108 = sadd.s32 %s107, 1
      %p111 = scmp.eq.s32.totalorder %s17, 5
      %p112 = scmp.ne.s32.totalorder %s107, %s109
      %p113 = scmp.eq.s32.totalorder %s17, 0
      %p114 = por %p112, %p113
      %p115 = scmp.ne.s32.totalorder %s107, %s109
      %p116 = scmp.eq.s32.totalorder %s22, 5
      %p117 = por %p115, %p116
      %p118 = scmp.ne.s32.totalorder %s109, %s110
      %p119 = scmp.eq.s32.totalorder %s22, 0
      %p120 = por %p118, %p119
      %p121 = scmp.ne.s32.totalorder %s109, %s110
      %p122 = scmp.eq.s32.totalorder %s23, 5
      %p123 = por %p121, %p122
      %p125 = scmp.ne.s32.totalorder %s110, %s124
      %p126 = scmp.eq.s32.totalorder %s23, 0
      %p127 = por %p125, %p126
      %s128 = ssub.s32 %s24, %s36
      %s129 = ssub.s32 %s25, %s32
      %s130 = sor.u32 %s128, %s129
      %p131 = scmp.eq.s32.totalorder %s130, 0
      %s133 = sadd.s32 %s132, 1
      %s134 = scalar_select %p131, %s132, %s133
      %p137 = pneg %p131
      %p138 = scmp.eq.s32.totalorder %s17, 5
      %p139 = por %p137, %p138
      %p140 = scmp.ne.s32.totalorder %s132, %s135
      %p141 = scmp.eq.s32.totalorder %s17, 0
      %p142 = por %p140, %p141
      %p143 = scmp.ne.s32.totalorder %s132, %s135
      %p144 = scmp.eq.s32.totalorder %s22, 5
      %p145 = por %p143, %p144
      %p146 = scmp.ne.s32.totalorder %s135, %s136
      %p147 = scmp.eq.s32.totalorder %s22, 0
      %p148 = por %p146, %p147
      %p149 = scmp.ne.s32.totalorder %s135, %s136
      %p150 = scmp.eq.s32.totalorder %s23, 5
      %p151 = por %p149, %p150
      %p153 = scmp.ne.s32.totalorder %s136, %s152
      %p154 = scmp.eq.s32.totalorder %s23, 0
      %p155 = por %p153, %p154
      %p156 = scmp.le.s32.totalorder 1, %s17
      %p157 = scmp.lt.s32.totalorder %s17, 7
      %p158 = pnand %p156, %p157
      %p159 = pneg %p158
      // Predicated region
      $region9: #{tpu_custom_call.1} parent=5 // pred_check
        _
      $region10: #{tpu_custom_call.1} parent=5 // pred_check_branch
        %161 = sbr.rel (%p158) target = $region12
      $region11: #{tpu_custom_call.1} parent=5 // pred_region
        %s162 = ssub.s32 %s17, 1
        // Predicated region
        $region13: #{tpu_custom_call.1} parent=11 // pred_check
          %p163 = pneg %p78
        $region14: #{tpu_custom_call.1} parent=11 // pred_check_branch
          %165 = sbr.rel (%p163) target = $region16
        $region15: #{tpu_custom_call.1} parent=11 // pred_region
          %s167 = ssub.s32 2048, 2048
          %168 = vsyncadd [#allocation6], %s167
          %s169 = sshll.u32 [#allocation5], 4
          %s170 = int_to_ptr.vmem [resolvable:$true] %s169
          %175 = dma.hbm_to_vmem [thread:$0]  %s1, 2048, %s170, [#allocation6], 64, 64, 4
        $region16: #{tpu_custom_call.1} parent=11 // pred_fallthru
          _
        // Predicated region
        $region17: #{tpu_custom_call.1} parent=11 // pred_check
          %p176 = pneg %p99
        $region18: #{tpu_custom_call.1} parent=11 // pred_check_branch
          %178 = sbr.rel (%p176) target = $region20
        $region19: #{tpu_custom_call.1} parent=11 // pred_region
          %s180 = ssub.s32 2048, 2048
          %181 = vsyncadd [#allocation6], %s180
          %s182 = sshll.u32 [#allocation7], 4
          %s183 = int_to_ptr.vmem [resolvable:$true] %s182
          %188 = dma.hbm_to_vmem [thread:$0]  %s2, 2048, %s183, [#allocation6], 64, 64, 4
        $region20: #{tpu_custom_call.1} parent=11 // pred_fallthru
          _
        // Predicated region
        $region21: #{tpu_custom_call.1} parent=11 // pred_check
          %p189 = pneg %p120
        $region22: #{tpu_custom_call.1} parent=11 // pred_check_branch
          %191 = sbr.rel (%p189) target = $region24
        $region23: #{tpu_custom_call.1} parent=11 // pred_region
          _
        $region24: #{tpu_custom_call.1} parent=11 // pred_fallthru
          _
      $region12: #{tpu_custom_call.1} parent=5 // pred_fallthru
        _
      %p192 = scmp.lt.s32.totalorder %s17, 6
      // Predicated region
      $region25: #{tpu_custom_call.1} parent=5 // pred_check
        %p193 = pneg %p192
      $region26: #{tpu_custom_call.1} parent=5 // pred_check_branch
        %195 = sbr.rel (%p193) target = $region28
      $region27: #{tpu_custom_call.1} parent=5 // pred_region
        // Predicated region
        $region29: #{tpu_custom_call.1} parent=27 // pred_check
          %p196 = pneg %p51
        $region30: #{tpu_custom_call.1} parent=27 // pred_check_branch
          %198 = sbr.rel (%p196) target = $region32
        $region31: #{tpu_custom_call.1} parent=27 // pred_region
          %s199 = sand.u32 %s41, 1
          %s200 = scalar_lea.sflag [#allocation3], %s199
          %s201 = sand.u32 %s41, 1
          %s202 = smul.addr %s201, 128
          %s203 = scalar_lea.vmem [#allocation2], %s202
          %s204 = smul.u32 8, %s24
          %s206 = ssub.s32 2048, 2048
          %207 = vsyncadd %s200, %s206
          %s208 = smul.addr %s204, 4
          %s209 = smul.addr %s25, 64
          %s210 = sadd.s32 %s208, %s209
          %s211 = smul.addr %s210, 64
          %s212 = scalar_lea.hbm %s0, %s211
          %s213 = sshll.u32 %s203, 4
          %s214 = int_to_ptr.vmem [resolvable:$true] %s213
          %219 = dma.hbm_to_vmem [thread:$0]  %s212, 2048, %s214, %s200, 128, 128, 8
        $region32: #{tpu_custom_call.1} parent=27 // pred_fallthru
          _
      $region28: #{tpu_custom_call.1} parent=5 // pred_fallthru
        _
      %p220 = scmp.le.s32.totalorder 1, %s17
      %p221 = scmp.lt.s32.totalorder %s17, 7
      %p222 = pnand %p220, %p221
      %p223 = pneg %p222
      // Predicated region
      $region33: #{tpu_custom_call.1} parent=5 // pred_check
        _
      $region34: #{tpu_custom_call.1} parent=5 // pred_check_branch
        %225 = sbr.rel (%p222) target = $region36
      $region35: #{tpu_custom_call.1} parent=5 // pred_region
        %s226 = ssub.s32 %s17, 1
        %s227 = sand.u32 %s44, 1
        %s228 = scalar_lea.sflag [#allocation3], %s227
        %s229 = sand.u32 %s44, 1
        %s230 = smul.addr %s229, 128
        %s231 = scalar_lea.vmem [#allocation2], %s230
        // Predicated region
        $region37: #{tpu_custom_call.1} parent=35 // pred_check
          %p232 = pneg %p57
        $region38: #{tpu_custom_call.1} parent=35 // pred_check_branch
          %234 = sbr.rel (%p232) target = $region40
        $region39: #{tpu_custom_call.1} parent=35 // pred_region
          %235 = dma.done %s228, 2048
        $region40: #{tpu_custom_call.1} parent=35 // pred_fallthru
          _
        // Predicated region
        $region41: #{tpu_custom_call.1} parent=35 // pred_check
          %p236 = pneg %p78
        $region42: #{tpu_custom_call.1} parent=35 // pred_check_branch
          %238 = sbr.rel (%p236) target = $region44
        $region43: #{tpu_custom_call.1} parent=35 // pred_region
          %239 = dma.done [#allocation6], 2048
        $region44: #{tpu_custom_call.1} parent=35 // pred_fallthru
          _
        // Predicated region
        $region45: #{tpu_custom_call.1} parent=35 // pred_check
          %p240 = pneg %p99
        $region46: #{tpu_custom_call.1} parent=35 // pred_check_branch
          %242 = sbr.rel (%p240) target = $region48
        $region47: #{tpu_custom_call.1} parent=35 // pred_region
          %243 = dma.done [#allocation6], 2048
        $region48: #{tpu_custom_call.1} parent=35 // pred_fallthru
          _
        %s244 = sand.u32 %s44, 1
        %s245 = scalar_lea.sflag [#allocation3], %s244
        %s246 = sand.u32 %s44, 1
        %s247 = smul.addr %s246, 128
        %s248 = scalar_lea.vmem [#allocation2], %s247
        %p249 = pneg %p57
        %p250 = pneg %p54
        %p251 = pneg %p78
        %p252 = pneg %p75
        %p253 = pneg %p99
        %p254 = pneg %p96
        %p255 = pneg %p120
        %p256 = pneg %p117
        %p257 = pneg %p148
        %p258 = pneg %p145
        %s259 = sand.u32 %s135, 1
        %s260 = scalar_lea.sflag [#allocation4], %s259
        %s261 = sand.u32 %s135, 1
        %s262 = smul.addr %s261, 8
        %s263 = scalar_lea.vmem [#allocation8], %s262
        %s264 = smul.u32 8, %s26
        %v266 = vld [vmem:[%s231] sm:$0xff]
        %v267 = vld [vmem:[%s231 + $0x8] sm:$0xff]
        %v268 = vld [vmem:[%s231 + $0x10] sm:$0xff]
        %v269 = vld [vmem:[%s231 + $0x18] sm:$0xff]
        %v270 = vld [vmem:[%s231 + $0x20] sm:$0xff]
        %v271 = vld [vmem:[%s231 + $0x28] sm:$0xff]
        %v272 = vld [vmem:[%s231 + $0x30] sm:$0xff]
        %v273 = vld [vmem:[%s231 + $0x38] sm:$0xff]
        %v274 = vld [vmem:[%s231 + $0x40] sm:$0xff]
        %v275 = vld [vmem:[%s231 + $0x48] sm:$0xff]
        %v276 = vld [vmem:[%s231 + $0x50] sm:$0xff]
        %v277 = vld [vmem:[%s231 + $0x58] sm:$0xff]
        %v278 = vld [vmem:[%s231 + $0x60] sm:$0xff]
        %v279 = vld [vmem:[%s231 + $0x68] sm:$0xff]
        %v280 = vld [vmem:[%s231 + $0x70] sm:$0xff]
        %v281 = vld [vmem:[%s231 + $0x78] sm:$0xff]
        %v282 = vunpack.c.l.bf16 %v266
        %v283 = vunpack.c.h.bf16 %v266
        %v284 = vunpack.c.l.bf16 %v267
        %v285 = vunpack.c.h.bf16 %v267
        %v286 = vunpack.c.l.bf16 %v268
        %v287 = vunpack.c.h.bf16 %v268
        %v288 = vunpack.c.l.bf16 %v269
        %v289 = vunpack.c.h.bf16 %v269
        %v290 = vunpack.c.l.bf16 %v270
        %v291 = vunpack.c.h.bf16 %v270
        %v292 = vunpack.c.l.bf16 %v271
        %v293 = vunpack.c.h.bf16 %v271
        %v294 = vunpack.c.l.bf16 %v272
        %v295 = vunpack.c.h.bf16 %v272
        %v296 = vunpack.c.l.bf16 %v273
        %v297 = vunpack.c.h.bf16 %v273
        %v298 = vunpack.c.l.bf16 %v274
        %v299 = vunpack.c.h.bf16 %v274
        %v300 = vunpack.c.l.bf16 %v275
        %v301 = vunpack.c.h.bf16 %v275
        %v302 = vunpack.c.l.bf16 %v276
        %v303 = vunpack.c.h.bf16 %v276
        %v304 = vunpack.c.l.bf16 %v277
        %v305 = vunpack.c.h.bf16 %v277
        %v306 = vunpack.c.l.bf16 %v278
        %v307 = vunpack.c.h.bf16 %v278
        %v308 = vunpack.c.l.bf16 %v279
        %v309 = vunpack.c.h.bf16 %v279
        %v310 = vunpack.c.l.bf16 %v280
        %v311 = vunpack.c.h.bf16 %v280
        %v312 = vunpack.c.l.bf16 %v281
        %v313 = vunpack.c.h.bf16 %v281
        %v314 = vadd.f32 %v282, %v284
        %v315 = vrot.slane %v314, 4
        %v316 = vadd.f32 %v314, %v315
        %v317 = vrot.slane %v316, 2
        %v318 = vadd.f32 %v316, %v317
        %v319 = vrot.slane %v318, 1
        %v320 = vadd.f32 %v318, %v319
        %v321 = vadd.f32 %v283, %v285
        %v322 = vrot.slane %v321, 4
        %v323 = vadd.f32 %v321, %v322
        %v324 = vrot.slane %v323, 2
        %v325 = vadd.f32 %v323, %v324
        %v326 = vrot.slane %v325, 1
        %v327 = vadd.f32 %v325, %v326
        %v328 = vadd.f32 %v286, %v288
        %v329 = vrot.slane %v328, 4
        %v330 = vadd.f32 %v328, %v329
        %v331 = vrot.slane %v330, 2
        %v332 = vadd.f32 %v330, %v331
        %v333 = vrot.slane %v332, 1
        %v334 = vadd.f32 %v332, %v333
        %v335 = vadd.f32 %v287, %v289
        %v336 = vrot.slane %v335, 4
        %v337 = vadd.f32 %v335, %v336
        %v338 = vrot.slane %v337, 2
        %v339 = vadd.f32 %v337, %v338
        %v340 = vrot.slane %v339, 1
        %v341 = vadd.f32 %v339, %v340
        %v342 = vadd.f32 %v290, %v292
        %v343 = vrot.slane %v342, 4
        %v344 = vadd.f32 %v342, %v343
        %v345 = vrot.slane %v344, 2
        %v346 = vadd.f32 %v344, %v345
        %v347 = vrot.slane %v346, 1
        %v348 = vadd.f32 %v346, %v347
        %v349 = vadd.f32 %v291, %v293
        %v350 = vrot.slane %v349, 4
        %v351 = vadd.f32 %v349, %v350
        %v352 = vrot.slane %v351, 2
        %v353 = vadd.f32 %v351, %v352
        %v354 = vrot.slane %v353, 1
        %v355 = vadd.f32 %v353, %v354
        %v356 = vadd.f32 %v294, %v296
        %v357 = vrot.slane %v356, 4
        %v358 = vadd.f32 %v356, %v357
        %v359 = vrot.slane %v358, 2
        %v360 = vadd.f32 %v358, %v359
        %v361 = vrot.slane %v360, 1
        %v362 = vadd.f32 %v360, %v361
        %v363 = vadd.f32 %v295, %v297
        %v364 = vrot.slane %v363, 4
        %v365 = vadd.f32 %v363, %v364
        %v366 = vrot.slane %v365, 2
        %v367 = vadd.f32 %v365, %v366
        %v368 = vrot.slane %v367, 1
        %v369 = vadd.f32 %v367, %v368
        %v370 = vadd.f32 %v298, %v300
        %v371 = vrot.slane %v370, 4
        %v372 = vadd.f32 %v370, %v371
        %v373 = vrot.slane %v372, 2
        %v374 = vadd.f32 %v372, %v373
        %v375 = vrot.slane %v374, 1
        %v376 = vadd.f32 %v374, %v375
        %v377 = vadd.f32 %v299, %v301
        %v378 = vrot.slane %v377, 4
        %v379 = vadd.f32 %v377, %v378
        %v380 = vrot.slane %v379, 2
        %v381 = vadd.f32 %v379, %v380
        %v382 = vrot.slane %v381, 1
        %v383 = vadd.f32 %v381, %v382
        %v384 = vadd.f32 %v302, %v304
        %v385 = vrot.slane %v384, 4
        %v386 = vadd.f32 %v384, %v385
        %v387 = vrot.slane %v386, 2
        %v388 = vadd.f32 %v386, %v387
        %v389 = vrot.slane %v388, 1
        %v390 = vadd.f32 %v388, %v389
        %v391 = vadd.f32 %v303, %v305
        %v392 = vrot.slane %v391, 4
        %v393 = vadd.f32 %v391, %v392
        %v394 = vrot.slane %v393, 2
        %v395 = vadd.f32 %v393, %v394
        %v396 = vrot.slane %v395, 1
        %v397 = vadd.f32 %v395, %v396
        %v398 = vadd.f32 %v306, %v308
        %v399 = vrot.slane %v398, 4
        %v400 = vadd.f32 %v398, %v399
        %v401 = vrot.slane %v400, 2
        %v402 = vadd.f32 %v400, %v401
        %v403 = vrot.slane %v402, 1
        %v404 = vadd.f32 %v402, %v403
        %v405 = vadd.f32 %v307, %v309
        %v406 = vrot.slane %v405, 4
        %v407 = vadd.f32 %v405, %v406
        %v408 = vrot.slane %v407, 2
        %v409 = vadd.f32 %v407, %v408
        %v410 = vrot.slane %v409, 1
        %v411 = vadd.f32 %v409, %v410
        %v412 = vadd.f32 %v310, %v312
        %v413 = vrot.slane %v412, 4
        %v414 = vadd.f32 %v412, %v413
        %v415 = vrot.slane %v414, 2
        %v416 = vadd.f32 %v414, %v415
        %v417 = vrot.slane %v416, 1
        %v418 = vadd.f32 %v416, %v417
        %v419 = vadd.f32 %v311, %v313
        %v420 = vrot.slane %v419, 4
        %v421 = vadd.f32 %v419, %v420
        %v422 = vrot.slane %v421, 2
        %v423 = vadd.f32 %v421, %v422
        %v424 = vrot.slane %v423, 1
        %v425 = vadd.f32 %v423, %v424
        %v442 = vunpack.c.l.b16 %v266
        %v443 = vunpack.c.h.b16 %v266
        %v444 = vunpack.c.l.b16 %v267
        %v445 = vunpack.c.h.b16 %v267
        %v446 = vunpack.c.l.b16 %v268
        %v447 = vunpack.c.h.b16 %v268
        %v448 = vunpack.c.l.b16 %v269
        %v449 = vunpack.c.h.b16 %v269
        %v450 = vunpack.c.l.b16 %v270
        %v451 = vunpack.c.h.b16 %v270
        %v452 = vunpack.c.l.b16 %v271
        %v453 = vunpack.c.h.b16 %v271
        %v454 = vunpack.c.l.b16 %v272
        %v455 = vunpack.c.h.b16 %v272
        %v456 = vunpack.c.l.b16 %v273
        %v457 = vunpack.c.h.b16 %v273
        %v458 = vunpack.c.l.b16 %v274
        %v459 = vunpack.c.h.b16 %v274
        %v460 = vunpack.c.l.b16 %v275
        %v461 = vunpack.c.h.b16 %v275
        %v462 = vunpack.c.l.b16 %v276
        %v463 = vunpack.c.h.b16 %v276
        %v464 = vunpack.c.l.b16 %v277
        %v465 = vunpack.c.h.b16 %v277
        %v466 = vunpack.c.l.b16 %v278
        %v467 = vunpack.c.h.b16 %v278
        %v468 = vunpack.c.l.b16 %v279
        %v469 = vunpack.c.h.b16 %v279
        %v470 = vunpack.c.l.b16 %v280
        %v471 = vunpack.c.h.b16 %v280
        %v472 = vunpack.c.l.b16 %v281
        %v473 = vunpack.c.h.b16 %v281
        %v474 = vpack.c.b16 %v444, %v442
        %v475 = vpack.c.b16 %v445, %v443
        %v476 = vpack.c.b16 %v448, %v446
        %v477 = vpack.c.b16 %v449, %v447
        %v478 = vpack.c.b16 %v452, %v450
        %v479 = vpack.c.b16 %v453, %v451
        %v480 = vpack.c.b16 %v456, %v454
        %v481 = vpack.c.b16 %v457, %v455
        %v482 = vpack.c.b16 %v460, %v458
        %v483 = vpack.c.b16 %v461, %v459
        %v484 = vpack.c.b16 %v464, %v462
        %v485 = vpack.c.b16 %v465, %v463
        %v486 = vpack.c.b16 %v468, %v466
        %v487 = vpack.c.b16 %v469, %v467
        %v488 = vpack.c.b16 %v472, %v470
        %v489 = vpack.c.b16 %v473, %v471
        %v506 = vunpack.i.l.bf16 %v474
        %v507 = vunpack.i.h.bf16 %v474
        %v508 = vmax.f32 %v506, %v507
        %v509 = vrot.slane %v508, 4
        %v510 = vmax.f32 %v508, %v509
        %v511 = vrot.slane %v510, 2
        %v512 = vmax.f32 %v510, %v511
        %v513 = vrot.slane %v512, 1
        %v514 = vmax.f32 %v512, %v513
        %v515 = vpack.i.bf16 %v514, %v514
        %v516 = vunpack.i.l.bf16 %v475
        %v517 = vunpack.i.h.bf16 %v475
        %v518 = vmax.f32 %v516, %v517
        %v519 = vrot.slane %v518, 4
        %v520 = vmax.f32 %v518, %v519
        %v521 = vrot.slane %v520, 2
        %v522 = vmax.f32 %v520, %v521
        %v523 = vrot.slane %v522, 1
        %v524 = vmax.f32 %v522, %v523
        %v525 = vpack.i.bf16 %v524, %v524
        %v526 = vunpack.i.l.bf16 %v476
        %v527 = vunpack.i.h.bf16 %v476
        %v528 = vmax.f32 %v526, %v527
        %v529 = vrot.slane %v528, 4
        %v530 = vmax.f32 %v528, %v529
        %v531 = vrot.slane %v530, 2
        %v532 = vmax.f32 %v530, %v531
        %v533 = vrot.slane %v532, 1
        %v534 = vmax.f32 %v532, %v533
        %v535 = vpack.i.bf16 %v534, %v534
        %v536 = vunpack.i.l.bf16 %v477
        %v537 = vunpack.i.h.bf16 %v477
        %v538 = vmax.f32 %v536, %v537
        %v539 = vrot.slane %v538, 4
        %v540 = vmax.f32 %v538, %v539
        %v541 = vrot.slane %v540, 2
        %v542 = vmax.f32 %v540, %v541
        %v543 = vrot.slane %v542, 1
        %v544 = vmax.f32 %v542, %v543
        %v545 = vpack.i.bf16 %v544, %v544
        %v546 = vunpack.i.l.bf16 %v478
        %v547 = vunpack.i.h.bf16 %v478
        %v548 = vmax.f32 %v546, %v547
        %v549 = vrot.slane %v548, 4
        %v550 = vmax.f32 %v548, %v549
        %v551 = vrot.slane %v550, 2
        %v552 = vmax.f32 %v550, %v551
        %v553 = vrot.slane %v552, 1
        %v554 = vmax.f32 %v552, %v553
        %v555 = vpack.i.bf16 %v554, %v554
        %v556 = vunpack.i.l.bf16 %v479
        %v557 = vunpack.i.h.bf16 %v479
        %v558 = vmax.f32 %v556, %v557
        %v559 = vrot.slane %v558, 4
        %v560 = vmax.f32 %v558, %v559
        %v561 = vrot.slane %v560, 2
        %v562 = vmax.f32 %v560, %v561
        %v563 = vrot.slane %v562, 1
        %v564 = vmax.f32 %v562, %v563
        %v565 = vpack.i.bf16 %v564, %v564
        %v566 = vunpack.i.l.bf16 %v480
        %v567 = vunpack.i.h.bf16 %v480
        %v568 = vmax.f32 %v566, %v567
        %v569 = vrot.slane %v568, 4
        %v570 = vmax.f32 %v568, %v569
        %v571 = vrot.slane %v570, 2
        %v572 = vmax.f32 %v570, %v571
        %v573 = vrot.slane %v572, 1
        %v574 = vmax.f32 %v572, %v573
        %v575 = vpack.i.bf16 %v574, %v574
        %v576 = vunpack.i.l.bf16 %v481
        %v577 = vunpack.i.h.bf16 %v481
        %v578 = vmax.f32 %v576, %v577
        %v579 = vrot.slane %v578, 4
        %v580 = vmax.f32 %v578, %v579
        %v581 = vrot.slane %v580, 2
        %v582 = vmax.f32 %v580, %v581
        %v583 = vrot.slane %v582, 1
        %v584 = vmax.f32 %v582, %v583
        %v585 = vpack.i.bf16 %v584, %v584
        %v586 = vunpack.i.l.bf16 %v482
        %v587 = vunpack.i.h.bf16 %v482
        %v588 = vmax.f32 %v586, %v587
        %v589 = vrot.slane %v588, 4
        %v590 = vmax.f32 %v588, %v589
        %v591 = vrot.slane %v590, 2
        %v592 = vmax.f32 %v590, %v591
        %v593 = vrot.slane %v592, 1
        %v594 = vmax.f32 %v592, %v593
        %v595 = vpack.i.bf16 %v594, %v594
        %v596 = vunpack.i.l.bf16 %v483
        %v597 = vunpack.i.h.bf16 %v483
        %v598 = vmax.f32 %v596, %v597
        %v599 = vrot.slane %v598, 4
        %v600 = vmax.f32 %v598, %v599
        %v601 = vrot.slane %v600, 2
        %v602 = vmax.f32 %v600, %v601
        %v603 = vrot.slane %v602, 1
        %v604 = vmax.f32 %v602, %v603
        %v605 = vpack.i.bf16 %v604, %v604
        %v606 = vunpack.i.l.bf16 %v484
        %v607 = vunpack.i.h.bf16 %v484
        %v608 = vmax.f32 %v606, %v607
        %v609 = vrot.slane %v608, 4
        %v610 = vmax.f32 %v608, %v609
        %v611 = vrot.slane %v610, 2
        %v612 = vmax.f32 %v610, %v611
        %v613 = vrot.slane %v612, 1
        %v614 = vmax.f32 %v612, %v613
        %v615 = vpack.i.bf16 %v614, %v614
        %v616 = vunpack.i.l.bf16 %v485
        %v617 = vunpack.i.h.bf16 %v485
        %v618 = vmax.f32 %v616, %v617
        %v619 = vrot.slane %v618, 4
        %v620 = vmax.f32 %v618, %v619
        %v621 = vrot.slane %v620, 2
        %v622 = vmax.f32 %v620, %v621
        %v623 = vrot.slane %v622, 1
        %v624 = vmax.f32 %v622, %v623
        %v625 = vpack.i.bf16 %v624, %v624
        %v626 = vunpack.i.l.bf16 %v486
        %v627 = vunpack.i.h.bf16 %v486
        %v628 = vmax.f32 %v626, %v627
        %v629 = vrot.slane %v628, 4
        %v630 = vmax.f32 %v628, %v629
        %v631 = vrot.slane %v630, 2
        %v632 = vmax.f32 %v630, %v631
        %v633 = vrot.slane %v632, 1
        %v634 = vmax.f32 %v632, %v633
        %v635 = vpack.i.bf16 %v634, %v634
        %v636 = vunpack.i.l.bf16 %v487
        %v637 = vunpack.i.h.bf16 %v487
        %v638 = vmax.f32 %v636, %v637
        %v639 = vrot.slane %v638, 4
        %v640 = vmax.f32 %v638, %v639
        %v641 = vrot.slane %v640, 2
        %v642 = vmax.f32 %v640, %v641
        %v643 = vrot.slane %v642, 1
        %v644 = vmax.f32 %v642, %v643
        %v645 = vpack.i.bf16 %v644, %v644
        %v646 = vunpack.i.l.bf16 %v488
        %v647 = vunpack.i.h.bf16 %v488
        %v648 = vmax.f32 %v646, %v647
        %v649 = vrot.slane %v648, 4
        %v650 = vmax.f32 %v648, %v649
        %v651 = vrot.slane %v650, 2
        %v652 = vmax.f32 %v650, %v651
        %v653 = vrot.slane %v652, 1
        %v654 = vmax.f32 %v652, %v653
        %v655 = vpack.i.bf16 %v654, %v654
        %v656 = vunpack.i.l.bf16 %v489
        %v657 = vunpack.i.h.bf16 %v489
        %v658 = vmax.f32 %v656, %v657
        %v659 = vrot.slane %v658, 4
        %v660 = vmax.f32 %v658, %v659
        %v661 = vrot.slane %v660, 2
        %v662 = vmax.f32 %v660, %v661
        %v663 = vrot.slane %v662, 1
        %v664 = vmax.f32 %v662, %v663
        %v665 = vpack.i.bf16 %v664, %v664
        %v666 = vpack.c.bf16 %v320, %v320
        %v667 = vpack.c.bf16 %v327, %v327
        %v668 = vpack.c.bf16 %v334, %v334
        %v669 = vpack.c.bf16 %v341, %v341
        %v670 = vpack.c.bf16 %v348, %v348
        %v671 = vpack.c.bf16 %v355, %v355
        %v672 = vpack.c.bf16 %v362, %v362
        %v673 = vpack.c.bf16 %v369, %v369
        %v674 = vpack.c.bf16 %v376, %v376
        %v675 = vpack.c.bf16 %v383, %v383
        %v676 = vpack.c.bf16 %v390, %v390
        %v677 = vpack.c.bf16 %v397, %v397
        %v678 = vpack.c.bf16 %v404, %v404
        %v679 = vpack.c.bf16 %v411, %v411
        %v680 = vpack.c.bf16 %v418, %v418
        %v681 = vpack.c.bf16 %v425, %v425
        %v682 = vld [vmem:[#allocation5] sm:$0xf]
        %v683 = vld [vmem:[#allocation5 + $0x4] sm:$0xf]
        %v684 = vld [vmem:[#allocation5 + $0x8] sm:$0xf]
        %v685 = vld [vmem:[#allocation5 + $0xc] sm:$0xf]
        %v686 = vld [vmem:[#allocation5 + $0x10] sm:$0xf]
        %v687 = vld [vmem:[#allocation5 + $0x14] sm:$0xf]
        %v688 = vld [vmem:[#allocation5 + $0x18] sm:$0xf]
        %v689 = vld [vmem:[#allocation5 + $0x1c] sm:$0xf]
        %v690 = vld [vmem:[#allocation5 + $0x20] sm:$0xf]
        %v691 = vld [vmem:[#allocation5 + $0x24] sm:$0xf]
        %v692 = vld [vmem:[#allocation5 + $0x28] sm:$0xf]
        %v693 = vld [vmem:[#allocation5 + $0x2c] sm:$0xf]
        %v694 = vld [vmem:[#allocation5 + $0x30] sm:$0xf]
        %v695 = vld [vmem:[#allocation5 + $0x34] sm:$0xf]
        %v696 = vld [vmem:[#allocation5 + $0x38] sm:$0xf]
        %v697 = vld [vmem:[#allocation5 + $0x3c] sm:$0xf]
        %v698 = vld [vmem:[#allocation5 + $0x40] sm:$0xf]
        %v699 = vld [vmem:[#allocation5 + $0x44] sm:$0xf]
        %v700 = vld [vmem:[#allocation5 + $0x48] sm:$0xf]
        %v701 = vld [vmem:[#allocation5 + $0x4c] sm:$0xf]
        %v702 = vld [vmem:[#allocation5 + $0x50] sm:$0xf]
        %v703 = vld [vmem:[#allocation5 + $0x54] sm:$0xf]
        %v704 = vld [vmem:[#allocation5 + $0x58] sm:$0xf]
        %v705 = vld [vmem:[#allocation5 + $0x5c] sm:$0xf]
        %v706 = vld [vmem:[#allocation5 + $0x60] sm:$0xf]
        %v707 = vld [vmem:[#allocation5 + $0x64] sm:$0xf]
        %v708 = vld [vmem:[#allocation5 + $0x68] sm:$0xf]
        %v709 = vld [vmem:[#allocation5 + $0x6c] sm:$0xf]
        %v710 = vld [vmem:[#allocation5 + $0x70] sm:$0xf]
        %v711 = vld [vmem:[#allocation5 + $0x74] sm:$0xf]
        %v712 = vld [vmem:[#allocation5 + $0x78] sm:$0xf]
        %v713 = vld [vmem:[#allocation5 + $0x7c] sm:$0xf]
        %v714 = vld [vmem:[#allocation7] sm:$0xf]
        %v715 = vld [vmem:[#allocation7 + $0x4] sm:$0xf]
        %v716 = vld [vmem:[#allocation7 + $0x8] sm:$0xf]
        %v717 = vld [vmem:[#allocation7 + $0xc] sm:$0xf]
        %v718 = vld [vmem:[#allocation7 + $0x10] sm:$0xf]
        %v719 = vld [vmem:[#allocation7 + $0x14] sm:$0xf]
        %v720 = vld [vmem:[#allocation7 + $0x18] sm:$0xf]
        %v721 = vld [vmem:[#allocation7 + $0x1c] sm:$0xf]
        %v722 = vld [vmem:[#allocation7 + $0x20] sm:$0xf]
        %v723 = vld [vmem:[#allocation7 + $0x24] sm:$0xf]
        %v724 = vld [vmem:[#allocation7 + $0x28] sm:$0xf]
        %v725 = vld [vmem:[#allocation7 + $0x2c] sm:$0xf]
        %v726 = vld [vmem:[#allocation7 + $0x30] sm:$0xf]
        %v727 = vld [vmem:[#allocation7 + $0x34] sm:$0xf]
        %v728 = vld [vmem:[#allocation7 + $0x38] sm:$0xf]
        %v729 = vld [vmem:[#allocation7 + $0x3c] sm:$0xf]
        %v730 = vld [vmem:[#allocation7 + $0x40] sm:$0xf]
        %v731 = vld [vmem:[#allocation7 + $0x44] sm:$0xf]
        %v732 = vld [vmem:[#allocation7 + $0x48] sm:$0xf]
        %v733 = vld [vmem:[#allocation7 + $0x4c] sm:$0xf]
        %v734 = vld [vmem:[#allocation7 + $0x50] sm:$0xf]
        %v735 = vld [vmem:[#allocation7 + $0x54] sm:$0xf]
        %v736 = vld [vmem:[#allocation7 + $0x58] sm:$0xf]
        %v737 = vld [vmem:[#allocation7 + $0x5c] sm:$0xf]
        %v738 = vld [vmem:[#allocation7 + $0x60] sm:$0xf]
        %v739 = vld [vmem:[#allocation7 + $0x64] sm:$0xf]
        %v740 = vld [vmem:[#allocation7 + $0x68] sm:$0xf]
        %v741 = vld [vmem:[#allocation7 + $0x6c] sm:$0xf]
        %v742 = vld [vmem:[#allocation7 + $0x70] sm:$0xf]
        %v743 = vld [vmem:[#allocation7 + $0x74] sm:$0xf]
        %v744 = vld [vmem:[#allocation7 + $0x78] sm:$0xf]
        %v745 = vld [vmem:[#allocation7 + $0x7c] sm:$0xf]
        %v762 = vunpack.c.l.b16 %v515
        %v763 = vunpack.c.l.b16 %v525
        %v764 = vunpack.c.l.b16 %v535
        %v765 = vunpack.c.l.b16 %v545
        %v766 = vunpack.c.l.b16 %v555
        %v767 = vunpack.c.l.b16 %v565
        %v768 = vunpack.c.l.b16 %v575
        %v769 = vunpack.c.l.b16 %v585
        %v770 = vunpack.c.l.b16 %v595
        %v771 = vunpack.c.l.b16 %v605
        %v772 = vunpack.c.l.b16 %v615
        %v773 = vunpack.c.l.b16 %v625
        %v774 = vunpack.c.l.b16 %v635
        %v775 = vunpack.c.l.b16 %v645
        %v776 = vunpack.c.l.b16 %v655
        %v777 = vunpack.c.l.b16 %v665
        %vm778 = vcmask 1041409
        %v779 = vsel %vm778, %v764, %v762
        %vm780 = vcmask 1042434
        %v781 = vsel %vm780, %v766, %v779
        %vm782 = vcmask 1043459
        %v783 = vsel %vm782, %v768, %v781
        %vm784 = vcmask 1044484
        %v785 = vsel %vm784, %v770, %v783
        %vm786 = vcmask 1045509
        %v787 = vsel %vm786, %v772, %v785
        %vm788 = vcmask 1046534
        %v789 = vsel %vm788, %v774, %v787
        %vm790 = vcmask 1047559
        %v791 = vsel %vm790, %v776, %v789
        %v792 = vsel %vm778, %v765, %v763
        %v793 = vsel %vm780, %v767, %v792
        %v794 = vsel %vm782, %v769, %v793
        %v795 = vsel %vm784, %v771, %v794
        %v796 = vsel %vm786, %v773, %v795
        %v797 = vsel %vm788, %v775, %v796
        %v798 = vsel %vm790, %v777, %v797
        %v799 = vpack.c.b16 %v791, %v791
        %v800 = vpack.c.b16 %v798, %v798
        %v835 = vunpack.c.l.b16 %v714
        %v836 = vunpack.c.l.b16 %v715
        %v837 = vunpack.c.l.b16 %v716
        %v838 = vunpack.c.l.b16 %v717
        %v839 = vunpack.c.l.b16 %v718
        %v840 = vunpack.c.l.b16 %v719
        %v841 = vunpack.c.l.b16 %v720
        %v842 = vunpack.c.l.b16 %v721
        %v843 = vunpack.c.l.b16 %v722
        %v844 = vunpack.c.l.b16 %v723
        %v845 = vunpack.c.l.b16 %v724
        %v846 = vunpack.c.l.b16 %v725
        %v847 = vunpack.c.l.b16 %v726
        %v848 = vunpack.c.l.b16 %v727
        %v849 = vunpack.c.l.b16 %v728
        %v850 = vunpack.c.l.b16 %v729
        %v851 = vunpack.c.l.b16 %v730
        %v852 = vunpack.c.l.b16 %v731
        %v853 = vunpack.c.l.b16 %v732
        %v854 = vunpack.c.l.b16 %v733
        %v855 = vunpack.c.l.b16 %v734
        %v856 = vunpack.c.l.b16 %v735
        %v857 = vunpack.c.l.b16 %v736
        %v858 = vunpack.c.l.b16 %v737
        %v859 = vunpack.c.l.b16 %v738
        %v860 = vunpack.c.l.b16 %v739
        %v861 = vunpack.c.l.b16 %v740
        %v862 = vunpack.c.l.b16 %v741
        %v863 = vunpack.c.l.b16 %v742
        %v864 = vunpack.c.l.b16 %v743
        %v865 = vunpack.c.l.b16 %v744
        %v866 = vunpack.c.l.b16 %v745
        %v867 = vpack.c.b16 %v836, %v835
        %v868 = vpack.c.b16 %v838, %v837
        %v869 = vpack.c.b16 %v840, %v839
        %v870 = vpack.c.b16 %v842, %v841
        %v871 = vpack.c.b16 %v844, %v843
        %v872 = vpack.c.b16 %v846, %v845
        %v873 = vpack.c.b16 %v848, %v847
        %v874 = vpack.c.b16 %v850, %v849
        %v875 = vpack.c.b16 %v852, %v851
        %v876 = vpack.c.b16 %v854, %v853
        %v877 = vpack.c.b16 %v856, %v855
        %v878 = vpack.c.b16 %v858, %v857
        %v879 = vpack.c.b16 %v860, %v859
        %v880 = vpack.c.b16 %v862, %v861
        %v881 = vpack.c.b16 %v864, %v863
        %v882 = vpack.c.b16 %v866, %v865
        %899 = vmatprep.subr.bf16.mxu0 0
        %900 = vmatpush1.bf16.msra.mxu0 %v867
        %901 = vmatprep.subr.bf16.mxu0 0
        %902 = vmatpush1.bf16.msra.mxu0 %v868
        %903 = vmatprep.subr.bf16.mxu0 0
        %904 = vmatpush1.bf16.msra.mxu0 %v869
        %905 = vmatprep.subr.bf16.mxu0 0
        %906 = vmatpush1.bf16.msra.mxu0 %v870
        %907 = vmatprep.subr.bf16.mxu0 0
        %908 = vmatpush1.bf16.msra.mxu0 %v871
        %909 = vmatprep.subr.bf16.mxu0 0
        %910 = vmatpush1.bf16.msra.mxu0 %v872
        %911 = vmatprep.subr.bf16.mxu0 0
        %912 = vmatpush1.bf16.msra.mxu0 %v873
        %913 = vmatprep.subr.bf16.mxu0 0
        %914 = vmatpush1.bf16.msra.mxu0 %v874
        %915 = vmatprep.subr.bf16.mxu0 0
        %916 = vmatpush1.bf16.msra.mxu0 %v875
        %917 = vmatprep.subr.bf16.mxu0 0
        %918 = vmatpush1.bf16.msra.mxu0 %v876
        %919 = vmatprep.subr.bf16.mxu0 0
        %920 = vmatpush1.bf16.msra.mxu0 %v877
        %921 = vmatprep.subr.bf16.mxu0 0
        %922 = vmatpush1.bf16.msra.mxu0 %v878
        %923 = vmatprep.subr.bf16.mxu0 0
        %924 = vmatpush1.bf16.msra.mxu0 %v879
        %925 = vmatprep.subr.bf16.mxu0 0
        %926 = vmatpush1.bf16.msra.mxu0 %v880
        %927 = vmatprep.subr.bf16.mxu0 0
        %928 = vmatpush1.bf16.msra.mxu0 %v881
        %929 = vmatprep.subr.bf16.mxu0 0
        %930 = vmatpush1.bf16.msra.mxu0 %v882
        %931 = vmatprep.mubr.bf16.mxu0 %v800
        %932 = vmatmul.mubr.bf16.gmra.mrb[0].mxu0 %v799
        %v933 = vpop.f32.mrb[0].mxu0
        %v934 = vadd.f32 0.0, %v933
        %v935 = vpop.f32.mrb[0].mxu0
        %v936 = vpop.f32.mrb[0].mxu0
        %v937 = vpop.f32.mrb[0].mxu0
        %938 = vdwg.mxu0
        %v955 = vunpack.c.l.b16 %v666
        %v956 = vunpack.c.l.b16 %v667
        %v957 = vunpack.c.l.b16 %v668
        %v958 = vunpack.c.l.b16 %v669
        %v959 = vunpack.c.l.b16 %v670
        %v960 = vunpack.c.l.b16 %v671
        %v961 = vunpack.c.l.b16 %v672
        %v962 = vunpack.c.l.b16 %v673
        %v963 = vunpack.c.l.b16 %v674
        %v964 = vunpack.c.l.b16 %v675
        %v965 = vunpack.c.l.b16 %v676
        %v966 = vunpack.c.l.b16 %v677
        %v967 = vunpack.c.l.b16 %v678
        %v968 = vunpack.c.l.b16 %v679
        %v969 = vunpack.c.l.b16 %v680
        %v970 = vunpack.c.l.b16 %v681
        %v971 = vsel %vm778, %v957, %v955
        %v972 = vsel %vm780, %v959, %v971
        %v973 = vsel %vm782, %v961, %v972
        %v974 = vsel %vm784, %v963, %v973
        %v975 = vsel %vm786, %v965, %v974
        %v976 = vsel %vm788, %v967, %v975
        %v977 = vsel %vm790, %v969, %v976
        %v978 = vsel %vm778, %v958, %v956
        %v979 = vsel %vm780, %v960, %v978
        %v980 = vsel %vm782, %v962, %v979
        %v981 = vsel %vm784, %v964, %v980
        %v982 = vsel %vm786, %v966, %v981
        %v983 = vsel %vm788, %v968, %v982
        %v984 = vsel %vm790, %v970, %v983
        %v985 = vpack.c.b16 %v977, %v977
        %v986 = vpack.c.b16 %v984, %v984
        %v1021 = vunpack.c.l.b16 %v682
        %v1022 = vunpack.c.l.b16 %v683
        %v1023 = vunpack.c.l.b16 %v684
        %v1024 = vunpack.c.l.b16 %v685
        %v1025 = vunpack.c.l.b16 %v686
        %v1026 = vunpack.c.l.b16 %v687
        %v1027 = vunpack.c.l.b16 %v688
        %v1028 = vunpack.c.l.b16 %v689
        %v1029 = vunpack.c.l.b16 %v690
        %v1030 = vunpack.c.l.b16 %v691
        %v1031 = vunpack.c.l.b16 %v692
        %v1032 = vunpack.c.l.b16 %v693
        %v1033 = vunpack.c.l.b16 %v694
        %v1034 = vunpack.c.l.b16 %v695
        %v1035 = vunpack.c.l.b16 %v696
        %v1036 = vunpack.c.l.b16 %v697
        %v1037 = vunpack.c.l.b16 %v698
        %v1038 = vunpack.c.l.b16 %v699
        %v1039 = vunpack.c.l.b16 %v700
        %v1040 = vunpack.c.l.b16 %v701
        %v1041 = vunpack.c.l.b16 %v702
        %v1042 = vunpack.c.l.b16 %v703
        %v1043 = vunpack.c.l.b16 %v704
        %v1044 = vunpack.c.l.b16 %v705
        %v1045 = vunpack.c.l.b16 %v706
        %v1046 = vunpack.c.l.b16 %v707
        %v1047 = vunpack.c.l.b16 %v708
        %v1048 = vunpack.c.l.b16 %v709
        %v1049 = vunpack.c.l.b16 %v710
        %v1050 = vunpack.c.l.b16 %v711
        %v1051 = vunpack.c.l.b16 %v712
        %v1052 = vunpack.c.l.b16 %v713
        %v1053 = vpack.c.b16 %v1022, %v1021
        %v1054 = vpack.c.b16 %v1024, %v1023
        %v1055 = vpack.c.b16 %v1026, %v1025
        %v1056 = vpack.c.b16 %v1028, %v1027
        %v1057 = vpack.c.b16 %v1030, %v1029
        %v1058 = vpack.c.b16 %v1032, %v1031
        %v1059 = vpack.c.b16 %v1034, %v1033
        %v1060 = vpack.c.b16 %v1036, %v1035
        %v1061 = vpack.c.b16 %v1038, %v1037
        %v1062 = vpack.c.b16 %v1040, %v1039
        %v1063 = vpack.c.b16 %v1042, %v1041
        %v1064 = vpack.c.b16 %v1044, %v1043
        %v1065 = vpack.c.b16 %v1046, %v1045
        %v1066 = vpack.c.b16 %v1048, %v1047
        %v1067 = vpack.c.b16 %v1050, %v1049
        %v1068 = vpack.c.b16 %v1052, %v1051
        %1085 = vmatprep.subr.bf16.mxu0 0
        %1086 = vmatpush1.bf16.msra.mxu0 %v1053
        %1087 = vmatprep.subr.bf16.mxu0 0
        %1088 = vmatpush1.bf16.msra.mxu0 %v1054
        %1089 = vmatprep.subr.bf16.mxu0 0
        %1090 = vmatpush1.bf16.msra.mxu0 %v1055
        %1091 = vmatprep.subr.bf16.mxu0 0
        %1092 = vmatpush1.bf16.msra.mxu0 %v1056
        %1093 = vmatprep.subr.bf16.mxu0 0
        %1094 = vmatpush1.bf16.msra.mxu0 %v1057
        %1095 = vmatprep.subr.bf16.mxu0 0
        %1096 = vmatpush1.bf16.msra.mxu0 %v1058
        %1097 = vmatprep.subr.bf16.mxu0 0
        %1098 = vmatpush1.bf16.msra.mxu0 %v1059
        %1099 = vmatprep.subr.bf16.mxu0 0
        %1100 = vmatpush1.bf16.msra.mxu0 %v1060
        %1101 = vmatprep.subr.bf16.mxu0 0
        %1102 = vmatpush1.bf16.msra.mxu0 %v1061
        %1103 = vmatprep.subr.bf16.mxu0 0
        %1104 = vmatpush1.bf16.msra.mxu0 %v1062
        %1105 = vmatprep.subr.bf16.mxu0 0
        %1106 = vmatpush1.bf16.msra.mxu0 %v1063
        %1107 = vmatprep.subr.bf16.mxu0 0
        %1108 = vmatpush1.bf16.msra.mxu0 %v1064
        %1109 = vmatprep.subr.bf16.mxu0 0
        %1110 = vmatpush1.bf16.msra.mxu0 %v1065
        %1111 = vmatprep.subr.bf16.mxu0 0
        %1112 = vmatpush1.bf16.msra.mxu0 %v1066
        %1113 = vmatprep.subr.bf16.mxu0 0
        %1114 = vmatpush1.bf16.msra.mxu0 %v1067
        %1115 = vmatprep.subr.bf16.mxu0 0
        %1116 = vmatpush1.bf16.msra.mxu0 %v1068
        %1117 = vmatprep.mubr.bf16.mxu0 %v986
        %1118 = vmatmul.mubr.bf16.gmra.mrb[0].mxu0 %v985
        %v1119 = vpop.f32.mrb[0].mxu0
        %v1120 = vadd.f32 %v934, %v1119
        %v1121 = vpop.f32.mrb[0].mxu0
        %v1122 = vpop.f32.mrb[0].mxu0
        %v1123 = vpop.f32.mrb[0].mxu0
        %1124 = vdwg.mxu0
        %v1125 = vld [vmem:[%s3] sm:$0x1]
        %v1127 = vlaneseq
        %v1128 = vshrl.u32 %v1127, 7
        %v1129 = vsub.s32 0, %v1128
        %v1130 = vrot.slane %v1125, %v1129
        %v1132 = vadd.f32 %v1120, %v1130
        %v1133 = vmax.f32 %v1132, 0.0
        %1134 = vst [vmem:[%s263] sm:$0xff] %v1133
        %s1135 = sand.u32 %s135, 1
        %s1136 = scalar_lea.sflag [#allocation4], %s1135
        %s1137 = sand.u32 %s135, 1
        %s1138 = smul.addr %s1137, 8
        %s1139 = scalar_lea.vmem [#allocation8], %s1138
        // Predicated region
        $region49: #{tpu_custom_call.1} parent=35 // pred_check
          %p1140 = pneg %p145
        $region50: #{tpu_custom_call.1} parent=35 // pred_check_branch
          %1142 = sbr.rel (%p1140) target = $region52
        $region51: #{tpu_custom_call.1} parent=35 // pred_region
          %s1144 = ssub.s32 128, 128
          %1145 = vsyncadd %s1136, %s1144
          %s1146 = smul.addr %s26, 3
          %s1147 = sadd.s32 %s27, %s1146
          %s1148 = smul.addr %s1147, 128
          %s1149 = scalar_lea.hbm %s4, %s1148
          %s1151 = sshll.u32 %s1139, 4
          %s1152 = int_to_ptr.vmem [resolvable:$true] %s1151
          %1154 = dma.vmem_to_hbm [thread:$0]  %s1152, 128, %s1149, %s1136
        $region52: #{tpu_custom_call.1} parent=35 // pred_fallthru
          _
      $region36: #{tpu_custom_call.1} parent=5 // pred_fallthru
        _
      %p1155 = scmp.le.s32.totalorder 2, %s17
      // Predicated region
      $region53: #{tpu_custom_call.1} parent=5 // pred_check
        %p1156 = pneg %p1155
      $region54: #{tpu_custom_call.1} parent=5 // pred_check_branch
        %1158 = sbr.rel (%p1156) target = $region56
      $region55: #{tpu_custom_call.1} parent=5 // pred_region
        %s1159 = ssub.s32 %s17, 2
        // Predicated region
        $region57: #{tpu_custom_call.1} parent=55 // pred_check
          %p1160 = pneg %p151
        $region58: #{tpu_custom_call.1} parent=55 // pred_check_branch
          %1162 = sbr.rel (%p1160) target = $region60
        $region59: #{tpu_custom_call.1} parent=55 // pred_region
          %s1163 = sand.u32 %s136, 1
          %s1164 = scalar_lea.sflag [#allocation4], %s1163
          %s1165 = sand.u32 %s136, 1
          %s1166 = smul.addr %s1165, 8
          %s1167 = scalar_lea.vmem [#allocation8], %s1166
          %1168 = dma.done %s1164, 128
        $region60: #{tpu_custom_call.1} parent=55 // pred_fallthru
          _
      $region56: #{tpu_custom_call.1} parent=5 // pred_fallthru
        _
    $region6: #{tpu_custom_call.1} parent=1 // loop_footer
      %s21 = sadd.s32 1, %s17
    $region7: #{tpu_custom_call.1} parent=1 // loop_footer_branch
      %16 = sbr.rel target = $region3
    $region8: #{tpu_custom_call.1} parent=1 // loop_exit
      _
    %1169 = vsyncpa [#allocation3], 1
    %s1170 = scalar_lea.sflag [#allocation3], 1
    %1171 = vsyncpa %s1170, 1
    %1172 = vsyncpa [#allocation6], 1
    %1173 = vsyncpa [#allocation4], 1
    %s1174 = scalar_lea.sflag [#allocation4], 1
    %1175 = vsyncpa %s1174, 1

</llo_original>
